<compile_context>
chip_gen: v7x
topology: tpu7x:2x2x1
jax: 0.10.0
libtpu: 0.0.40
codegen_flags: <defaults>
</compile_context>

<pallas_src>
import jax
import jax.numpy as jnp
from jax.experimental import pallas as pl
from jax.experimental.pallas import tpu as pltpu

MAX_SEQ_LEN = 60
INPUT_SIZE = 2
D_FLAT = MAX_SEQ_LEN * INPUT_SIZE     # 120
H1, H2, H3 = 100, 50, 30              # encoder widths (H3 = latent dim)
D1, D2 = 50, 100                      # decoder widths
LANE = 128                            # lane-padded width used inside the kernel
PRED_LANE = D_FLAT                    # output lane carrying sigmoid(classifier)
CLS_LANE = LANE - 1                   # lane of dec1 weight/bias carrying the classifier


def sdae_kernel(x_ref, w_ref, b_ref, out_ref):
    """x_ref (block_b,128) f32; w_ref (6,128,128) bf16 (enc1,enc2,enc3,dec1+cls,dec2,dec3);
    b_ref (8,128) f32 (rows: b1,b2,b3,bd1(+bc@lane127),bd2,bd3,0,0).
    out_ref (block_b,128) f32: lanes 0..119 = recon, lane 120 = pred."""
    f32 = jnp.float32
    bf16 = jnp.bfloat16

    x = x_ref[...].astype(bf16)                                            # (B, 128)

    # ---- encoder (MXU matmuls in bf16, f32 accumulate; tanh on EUP in f32) ----
    h = jnp.tanh(jnp.dot(x, w_ref[0], preferred_element_type=f32) + b_ref[0:1, :])
    h = jnp.tanh(jnp.dot(h.astype(bf16), w_ref[1], preferred_element_type=f32)
                 + b_ref[1:2, :])
    z = jnp.tanh(jnp.dot(h.astype(bf16), w_ref[2], preferred_element_type=f32)
                 + b_ref[2:3, :])                                          # latent

    # ---- decoder layer 1 with fused classifier (lane CLS_LANE = z@wc + bc) ----
    d_pre = (jnp.dot(z.astype(bf16), w_ref[3], preferred_element_type=f32)
             + b_ref[3:4, :])
    logit = d_pre[:, CLS_LANE:CLS_LANE + 1]                                # (B, 1)
    pred = pl.reciprocal(1.0 + jnp.exp(-logit), approx=True)              # sigmoid

    d = jnp.maximum(d_pre, 0.0)        # relu; junk in lane 127 is zeroed by w_ref[4]
    d = jnp.maximum(jnp.dot(d.astype(bf16), w_ref[4], preferred_element_type=f32)
                    + b_ref[4:5, :], 0.0)
    recon = (jnp.dot(d.astype(bf16), w_ref[5], preferred_element_type=f32)
             + b_ref[5:6, :])          # lanes >= 120 are exactly zero

    # ---- single lane-dense store: recon with pred tucked into lane 120 --------
    lane = jax.lax.broadcasted_iota(jnp.int32, out_ref.shape, 1)
    out_ref[...] = jnp.where(lane == PRED_LANE, pred, recon)


# ---------------------------------------------------------------------------
# Parameter construction / one-time packing (hoisted out of the forward).
# ---------------------------------------------------------------------------
def init_raw_params(key, scale=0.1):
    """Torch-like Linear params stored as (in, out) matrices (weight.T) + bias."""
    def lin(k, fan_in, fan_out):
        kw, kb = jax.random.split(k)
        return (scale * jax.random.normal(kw, (fan_in, fan_out), jnp.float32),
                scale * jax.random.normal(kb, (fan_out,), jnp.float32))
    ks = jax.random.split(key, 7)
    return {
        "enc1": lin(ks[0], D_FLAT, H1),
        "enc2": lin(ks[1], H1, H2),
        "enc3": lin(ks[2], H2, H3),
        "cls":  lin(ks[3], H3, 1),
        "dec1": lin(ks[4], H3, D1),
        "dec2": lin(ks[5], D1, D2),
        "dec3": lin(ks[6], D2, D_FLAT),
    }


def prepare_params(raw):
    """Pack everything ONCE into a stacked bf16 weight tensor and an f32 bias slab."""
    def pad_mat(w):
        return jnp.zeros((LANE, LANE), jnp.float32).at[:w.shape[0], :w.shape[1]].set(w)

    def pad_vec(b):
        return jnp.zeros((LANE,), jnp.float32).at[:b.shape[0]].set(b)

    wc, bc = raw["cls"]                                              # (30, 1), (1,)
    wd1 = pad_mat(raw["dec1"][0]).at[:H3, CLS_LANE].set(wc[:, 0])    # fuse classifier
    bd1 = pad_vec(raw["dec1"][1]).at[CLS_LANE].set(bc[0])

    w_stack = jnp.stack([
        pad_mat(raw["enc1"][0]), pad_mat(raw["enc2"][0]), pad_mat(raw["enc3"][0]),
        wd1, pad_mat(raw["dec2"][0]), pad_mat(raw["dec3"][0]),
    ]).astype(jnp.bfloat16)                                          # (6, 128, 128)

    b_stack = jnp.stack([
        pad_vec(raw["enc1"][1]), pad_vec(raw["enc2"][1]), pad_vec(raw["enc3"][1]),
        bd1, pad_vec(raw["dec2"][1]), pad_vec(raw["dec3"][1]),
        jnp.zeros((LANE,), jnp.float32), jnp.zeros((LANE,), jnp.float32),
    ])                                                               # (8, 128) f32
    return {"w": w_stack, "b": b_stack}


# ---------------------------------------------------------------------------
# Forward (both the batch_size=1 path and the batched x_lengths path).
# ---------------------------------------------------------------------------
def _round_up(n, m):
    return ((n + m - 1) // m) * m


def make_padded_x(X, x_lengths=None):
    """Torch pad / truncate / permute / flatten: (B,S,2)[, lengths] -> (B,120) f32."""
    B, S, _ = X.shape
    L = min(S, MAX_SEQ_LEN)
    padded = jnp.zeros((B, MAX_SEQ_LEN, INPUT_SIZE), jnp.float32)
    padded = padded.at[:, :L, :].set(X[:, :L, :].astype(jnp.float32))
    if x_lengths is not None:
        t = jnp.arange(MAX_SEQ_LEN)[None, :, None]
        lens = jnp.minimum(jnp.asarray(x_lengths), MAX_SEQ_LEN)[:, None, None]
        padded = jnp.where(t < lens, padded, 0.0)
    return jnp.transpose(padded, (0, 2, 1)).reshape(B, D_FLAT)


@jax.jit
def sdae_forward(X, params, x_lengths=None):
    """X: (B, S, 2). Returns (pred (B,), recon (B, 120), padded_x (B, 120))."""
    assert X.ndim == 3 and X.shape[2] == INPUT_SIZE
    flat = make_padded_x(X, x_lengths)                               # (B, 120)
    B = flat.shape[0]

    block_b = min(256, _round_up(B, 8))   # >=8 sublanes; 256 fills v6e/v7x MXU
    b_pad = _round_up(B, block_b)
    x_in = jnp.zeros((b_pad, LANE), jnp.float32).at[:B, :D_FLAT].set(flat)

    out = pl.pallas_call(
        sdae_kernel,
        out_shape=jax.ShapeDtypeStruct((b_pad, LANE), jnp.float32),
        grid=(b_pad // block_b,),
        in_specs=[
            pl.BlockSpec((block_b, LANE), lambda b: (b, 0)),         # activations: tiled
            pl.BlockSpec((6, LANE, LANE), lambda b: (0, 0, 0)),      # weights: resident
            pl.BlockSpec((8, LANE), lambda b: (0, 0)),               # biases:  resident
        ],
        out_specs=pl.BlockSpec((block_b, LANE), lambda b: (b, 0)),
        compiler_params=pltpu.CompilerParams(
            dimension_semantics=("parallel",)),
    )(x_in, params["w"], params["b"])

    pred = out[:B, PRED_LANE]                                        # (B,)
    recon = out[:B, :D_FLAT]                                         # (B, 120)
    return pred, recon, flat


if __name__ == "__main__":
    key = jax.random.PRNGKey(0)
    k_x, k_b, k_p = jax.random.split(key, 3)

    raw = init_raw_params(k_p)
    pp = prepare_params(raw)            # packed / bf16-cast once, reused per call

    # ---- pure-JAX f32 reference ------------------------------------------------
    def ref_forward(flat, raw):
        h = jnp.tanh(flat @ raw["enc1"][0] + raw["enc1"][1])
        h = jnp.tanh(h @ raw["enc2"][0] + raw["enc2"][1])
        z = jnp.tanh(h @ raw["enc3"][0] + raw["enc3"][1])
        p = jax.nn.sigmoid(z @ raw["cls"][0] + raw["cls"][1]).reshape(-1)
        d = jax.nn.relu(z @ raw["dec1"][0] + raw["dec1"][1])
        d = jax.nn.relu(d @ raw["dec2"][0] + raw["dec2"][1])
        r = d @ raw["dec3"][0] + raw["dec3"][1]
        return p, r

    # ---- batch_size=1 path (torch default) -------------------------------------
    S = 8                                       # flow shorter than max_seq_len=60
    x1 = jax.random.uniform(k_x, (1, S, INPUT_SIZE), dtype=jnp.float32)
    pred1, recon1, padded1 = sdae_forward(x1, pp)
    jax.block_until_ready((pred1, recon1, padded1))

    f1 = make_padded_x(x1)
    p1_ref, r1_ref = ref_forward(f1, raw)
    assert pred1.shape == (1,) and recon1.shape == (1, D_FLAT) and padded1.shape == (1, D_FLAT)
    assert jnp.allclose(padded1, f1, atol=1e-6)
    assert jnp.allclose(pred1, p1_ref, atol=2e-2, rtol=2e-2)
    assert jnp.allclose(recon1, r1_ref, atol=2e-2, rtol=2e-2)

    # ---- batched path with per-sample lengths ----------------------------------
    B, S2 = 4, 16
    xb = jax.random.uniform(k_b, (B, S2, INPUT_SIZE), dtype=jnp.float32)
    lens = jnp.array([16, 3, 9, 1], dtype=jnp.int32)
    predb, reconb, paddedb = sdae_forward(xb, pp, lens)
    jax.block_until_ready((predb, reconb, paddedb))

    fb = make_padded_x(xb, lens)
    pb_ref, rb_ref = ref_forward(fb, raw)
    assert predb.shape == (B,) and reconb.shape == (B, D_FLAT) and paddedb.shape == (B, D_FLAT)
    assert jnp.allclose(paddedb, fb, atol=1e-6)
    assert jnp.allclose(predb, pb_ref, atol=2e-2, rtol=2e-2)
    assert jnp.allclose(reconb, rb_ref, atol=2e-2, rtol=2e-2)

    print("KERNEL_OK")
</pallas_src>

<mosaic_0001>
module attributes {stable_mosaic.version = 11 : i64} {
  func.func @sdae_kernel(%arg0: i32, %arg1: memref<8x128xf32, #tpu.memory_space<vmem>>, %arg2: memref<6x128x128xbf16, #tpu.memory_space<vmem>>, %arg3: memref<8x128xf32, #tpu.memory_space<vmem>>, %arg4: memref<8x128xf32, #tpu.memory_space<vmem>>) attributes {dimension_semantics = [#tpu.dimension_semantics<parallel>], iteration_bounds = array<i64: 1>, scalar_prefetch = 0 : i64, scratch_operands = 0 : i64, tpu.core_type = #tpu.core_type<tc>, window_params = [{transform_indices = @transform_0, window_bounds = array<i64: 8, 128>}, {pipeline_mode = #tpu.pipeline_mode<synchronous>, transform_indices = @transform_1, window_bounds = array<i64: 6, 128, 128>}, {pipeline_mode = #tpu.pipeline_mode<synchronous>, transform_indices = @transform_2, window_bounds = array<i64: 8, 128>}, {transform_indices = @transform_3, window_bounds = array<i64: 8, 128>}]} {
    %c0 = arith.constant 0 : index
    %c0_0 = arith.constant 0 : index
    %0 = vector.load %arg1[%c0, %c0_0] : memref<8x128xf32, #tpu.memory_space<vmem>>, vector<8x128xf32>
    %1 = arith.truncf %0 : vector<8x128xf32> to vector<8x128xbf16>
    %c0_1 = arith.constant 0 : index
    %c0_2 = arith.constant 0 : index
    %c0_3 = arith.constant 0 : index
    %2 = vector.load %arg2[%c0_1, %c0_2, %c0_3] : memref<6x128x128xbf16, #tpu.memory_space<vmem>>, vector<1x128x128xbf16>
    %3 = vector.shape_cast %2 : vector<1x128x128xbf16> to vector<128x128xbf16>
    %cst = arith.constant dense<0.000000e+00> : vector<8x128xf32>
    %4 = tpu.matmul %1, %3, %cst {dimension_numbers = #tpu.dot_dimension_numbers<[1], [0], [0], [1], [0, 0, 1, 1], [], []>} : vector<8x128xbf16>, vector<128x128xbf16>, vector<8x128xf32> -> vector<8x128xf32>
    %c0_4 = arith.constant 0 : index
    %c0_5 = arith.constant 0 : index
    %5 = vector.load %arg3[%c0_4, %c0_5] : memref<8x128xf32, #tpu.memory_space<vmem>>, vector<1x128xf32>
    %6 = vector.broadcast %5 : vector<1x128xf32> to vector<8x128xf32>
    %7 = arith.addf %4, %6 : vector<8x128xf32>
    %8 = math.tanh %7 : vector<8x128xf32>
    %9 = arith.truncf %8 : vector<8x128xf32> to vector<8x128xbf16>
    %c1 = arith.constant 1 : index
    %c0_6 = arith.constant 0 : index
    %c0_7 = arith.constant 0 : index
    %10 = vector.load %arg2[%c1, %c0_6, %c0_7] : memref<6x128x128xbf16, #tpu.memory_space<vmem>>, vector<1x128x128xbf16>
    %11 = vector.shape_cast %10 : vector<1x128x128xbf16> to vector<128x128xbf16>
    %cst_8 = arith.constant dense<0.000000e+00> : vector<8x128xf32>
    %12 = tpu.matmul %9, %11, %cst_8 {dimension_numbers = #tpu.dot_dimension_numbers<[1], [0], [0], [1], [0, 0, 1, 1], [], []>} : vector<8x128xbf16>, vector<128x128xbf16>, vector<8x128xf32> -> vector<8x128xf32>
    %c1_9 = arith.constant 1 : index
    %c0_10 = arith.constant 0 : index
    %13 = vector.load %arg3[%c1_9, %c0_10] : memref<8x128xf32, #tpu.memory_space<vmem>>, vector<1x128xf32>
    %14 = vector.broadcast %13 : vector<1x128xf32> to vector<8x128xf32>
    %15 = arith.addf %12, %14 : vector<8x128xf32>
    %16 = math.tanh %15 : vector<8x128xf32>
    %17 = arith.truncf %16 : vector<8x128xf32> to vector<8x128xbf16>
    %c2 = arith.constant 2 : index
    %c0_11 = arith.constant 0 : index
    %c0_12 = arith.constant 0 : index
    %18 = vector.load %arg2[%c2, %c0_11, %c0_12] : memref<6x128x128xbf16, #tpu.memory_space<vmem>>, vector<1x128x128xbf16>
    %19 = vector.shape_cast %18 : vector<1x128x128xbf16> to vector<128x128xbf16>
    %cst_13 = arith.constant dense<0.000000e+00> : vector<8x128xf32>
    %20 = tpu.matmul %17, %19, %cst_13 {dimension_numbers = #tpu.dot_dimension_numbers<[1], [0], [0], [1], [0, 0, 1, 1], [], []>} : vector<8x128xbf16>, vector<128x128xbf16>, vector<8x128xf32> -> vector<8x128xf32>
    %c2_14 = arith.constant 2 : index
    %c0_15 = arith.constant 0 : index
    %21 = vector.load %arg3[%c2_14, %c0_15] : memref<8x128xf32, #tpu.memory_space<vmem>>, vector<1x128xf32>
    %22 = vector.broadcast %21 : vector<1x128xf32> to vector<8x128xf32>
    %23 = arith.addf %20, %22 : vector<8x128xf32>
    %24 = math.tanh %23 : vector<8x128xf32>
    %25 = arith.truncf %24 : vector<8x128xf32> to vector<8x128xbf16>
    %c3 = arith.constant 3 : index
    %c0_16 = arith.constant 0 : index
    %c0_17 = arith.constant 0 : index
    %26 = vector.load %arg2[%c3, %c0_16, %c0_17] : memref<6x128x128xbf16, #tpu.memory_space<vmem>>, vector<1x128x128xbf16>
    %27 = vector.shape_cast %26 : vector<1x128x128xbf16> to vector<128x128xbf16>
    %cst_18 = arith.constant dense<0.000000e+00> : vector<8x128xf32>
    %28 = tpu.matmul %25, %27, %cst_18 {dimension_numbers = #tpu.dot_dimension_numbers<[1], [0], [0], [1], [0, 0, 1, 1], [], []>} : vector<8x128xbf16>, vector<128x128xbf16>, vector<8x128xf32> -> vector<8x128xf32>
    %c3_19 = arith.constant 3 : index
    %c0_20 = arith.constant 0 : index
    %29 = vector.load %arg3[%c3_19, %c0_20] : memref<8x128xf32, #tpu.memory_space<vmem>>, vector<1x128xf32>
    %30 = vector.broadcast %29 : vector<1x128xf32> to vector<8x128xf32>
    %31 = arith.addf %28, %30 : vector<8x128xf32>
    %32 = vector.extract_strided_slice %31 {offsets = [0, 127], sizes = [8, 1], strides = [1, 1]} : vector<8x128xf32> to vector<8x1xf32>
    %cst_21 = arith.constant 0.000000e+00 : f32
    %33 = vector.broadcast %cst_21 : f32 to vector<8x1xf32>
    %34 = arith.subf %33, %32 : vector<8x1xf32>
    %35 = math.exp %34 : vector<8x1xf32>
    %cst_22 = arith.constant 1.000000e+00 : f32
    %36 = vector.broadcast %cst_22 : f32 to vector<8x1xf32>
    %37 = arith.addf %36, %35 : vector<8x1xf32>
    %38 = tpu.reciprocal %37 {approx = true} : vector<8x1xf32> -> vector<8x1xf32>
    %cst_23 = arith.constant 0.000000e+00 : f32
    %39 = vector.broadcast %cst_23 : f32 to vector<8x128xf32>
    %40 = arith.maximumf %31, %39 : vector<8x128xf32>
    %41 = arith.truncf %40 : vector<8x128xf32> to vector<8x128xbf16>
    %c4 = arith.constant 4 : index
    %c0_24 = arith.constant 0 : index
    %c0_25 = arith.constant 0 : index
    %42 = vector.load %arg2[%c4, %c0_24, %c0_25] : memref<6x128x128xbf16, #tpu.memory_space<vmem>>, vector<1x128x128xbf16>
    %43 = vector.shape_cast %42 : vector<1x128x128xbf16> to vector<128x128xbf16>
    %cst_26 = arith.constant dense<0.000000e+00> : vector<8x128xf32>
    %44 = tpu.matmul %41, %43, %cst_26 {dimension_numbers = #tpu.dot_dimension_numbers<[1], [0], [0], [1], [0, 0, 1, 1], [], []>} : vector<8x128xbf16>, vector<128x128xbf16>, vector<8x128xf32> -> vector<8x128xf32>
    %c4_27 = arith.constant 4 : index
    %c0_28 = arith.constant 0 : index
    %45 = vector.load %arg3[%c4_27, %c0_28] : memref<8x128xf32, #tpu.memory_space<vmem>>, vector<1x128xf32>
    %46 = vector.broadcast %45 : vector<1x128xf32> to vector<8x128xf32>
    %47 = arith.addf %44, %46 : vector<8x128xf32>
    %cst_29 = arith.constant 0.000000e+00 : f32
    %48 = vector.broadcast %cst_29 : f32 to vector<8x128xf32>
    %49 = arith.maximumf %47, %48 : vector<8x128xf32>
    %50 = arith.truncf %49 : vector<8x128xf32> to vector<8x128xbf16>
    %c5 = arith.constant 5 : index
    %c0_30 = arith.constant 0 : index
    %c0_31 = arith.constant 0 : index
    %51 = vector.load %arg2[%c5, %c0_30, %c0_31] : memref<6x128x128xbf16, #tpu.memory_space<vmem>>, vector<1x128x128xbf16>
    %52 = vector.shape_cast %51 : vector<1x128x128xbf16> to vector<128x128xbf16>
    %cst_32 = arith.constant dense<0.000000e+00> : vector<8x128xf32>
    %53 = tpu.matmul %50, %52, %cst_32 {dimension_numbers = #tpu.dot_dimension_numbers<[1], [0], [0], [1], [0, 0, 1, 1], [], []>} : vector<8x128xbf16>, vector<128x128xbf16>, vector<8x128xf32> -> vector<8x128xf32>
    %c5_33 = arith.constant 5 : index
    %c0_34 = arith.constant 0 : index
    %54 = vector.load %arg3[%c5_33, %c0_34] : memref<8x128xf32, #tpu.memory_space<vmem>>, vector<1x128xf32>
    %55 = vector.broadcast %54 : vector<1x128xf32> to vector<8x128xf32>
    %56 = arith.addf %53, %55 : vector<8x128xf32>
    %57 = tpu.iota {dimensions = array<i32: 1>} : vector<8x128xi32>
    %c120_i32 = arith.constant 120 : i32
    %58 = vector.broadcast %c120_i32 : i32 to vector<8x128xi32>
    %59 = arith.cmpi eq, %57, %58 : vector<8x128xi32>
    %60 = vector.shape_cast %38 : vector<8x1xf32> to vector<8x1xf32>
    %61 = vector.broadcast %60 : vector<8x1xf32> to vector<8x128xf32>
    %62 = arith.select %59, %61, %56 : vector<8x128xi1>, vector<8x128xf32>
    %c0_35 = arith.constant 0 : index
    %c0_36 = arith.constant 0 : index
    %63 = vector.load %arg4[%c0_35, %c0_36] : memref<8x128xf32, #tpu.memory_space<vmem>>, vector<8x128xf32>
    tpu.vector_store %arg4[%c0_35, %c0_36], %62 {strides = array<i32>} : memref<8x128xf32, #tpu.memory_space<vmem>>, vector<8x128xf32>,
    return
  }
  func.func @transform_0(%arg0: i32) -> (i32, i32) {
    %c0_i32 = arith.constant 0 : i32
    %c0_i32_0 = arith.constant 0 : i32
    return %arg0, %c0_i32 : i32, i32
  }
  func.func @transform_1(%arg0: i32) -> (i32, i32, i32) {
    %c0_i32 = arith.constant 0 : i32
    %c0_i32_0 = arith.constant 0 : i32
    %c0_i32_1 = arith.constant 0 : i32
    %c0_i32_2 = arith.constant 0 : i32
    return %c0_i32, %c0_i32_0, %c0_i32_1 : i32, i32, i32
  }
  func.func @transform_2(%arg0: i32) -> (i32, i32) {
    %c0_i32 = arith.constant 0 : i32
    %c0_i32_0 = arith.constant 0 : i32
    %c0_i32_1 = arith.constant 0 : i32
    return %c0_i32, %c0_i32_0 : i32, i32
  }
  func.func @transform_3(%arg0: i32) -> (i32, i32) {
    %c0_i32 = arith.constant 0 : i32
    %c0_i32_0 = arith.constant 0 : i32
    return %arg0, %c0_i32 : i32, i32
  }
}

</mosaic_0001>

<llo_original>
// kernel: sdae_forward.1
$region0: #{sdae_forward.1}
  #allocation0 [shape = 'u32[]', space=smem, size = 0x4, offset = 0x4, fixed_abs, tag = 'smem constant byte address 0x4 - core index']
  #allocation1 [shape = 'u32[144,128]{1,0:T(1,128)}', space=vmem, size = 0x12000, scoped, tag = 'internal scratch']
  %s0 = inlined_call_operand.vmem [shape: f32[8,128], index: 0, kind: input, shape index: {}]
  %s1 = inlined_call_operand.hbm [shape: bf16[6,128,128], index: 1, kind: input, shape index: {}]
  %s2 = inlined_call_operand.vmem [shape: f32[8,128], index: 2, kind: input, shape index: {}]
  %s3 = inlined_call_operand.vmem [shape: f32[8,128], index: 3, kind: output, shape index: {}]
  %s4 = sld [smem:[#allocation0]]
  $region26: #{sdae_forward.1} parent=0
    _
  %s6 = ssub.s32 1, %s4
  %s7 = scalar_select 0, %s6, %s4
  $region1: #{sdae_forward.1} parent=0
    #allocation2 [shape = 'u8[196608]{0}', space=vmem, size = 0x30000, scoped, tag = 'input window, operand 1, single buffered']
    #allocation3 [shape = 's32[1]{0}', space=sflag, size = 0x4, scoped, tag = 'scoped memory for sdae_forward.1']
    %8 = vsyncpa [#allocation3], 0
    // Predicated region
    $region2: #{sdae_forward.1} parent=1 // pred_check
      _
    $region3: #{sdae_forward.1} parent=1 // pred_check_branch
      %10 = sbr.rel (0) target = $region5
    $region4: #{sdae_forward.1} parent=1 // pred_region
      _
    $region5: #{sdae_forward.1} parent=1 // pred_fallthru
      _
    // Predicated region
    $region6: #{sdae_forward.1} parent=1 // pred_check
      _
    $region7: #{sdae_forward.1} parent=1 // pred_check_branch
      %12 = sbr.rel (0) target = $region9
    $region8: #{sdae_forward.1} parent=1 // pred_region
      %s14 = ssub.s32 6144, 6144
      %15 = vsyncadd [#allocation3], %s14
      %s16 = sshll.u32 [#allocation2], 4
      %s17 = int_to_ptr.vmem [resolvable:$true] %s16
      %22 = dma.hbm_to_vmem [thread:$0]  %s1, 6144, %s17, [#allocation3], 64, 64, 4
    $region9: #{sdae_forward.1} parent=1 // pred_fallthru
      _
    // Predicated region
    $region10: #{sdae_forward.1} parent=1 // pred_check
      _
    $region11: #{sdae_forward.1} parent=1 // pred_check_branch
      %24 = sbr.rel (0) target = $region13
    $region12: #{sdae_forward.1} parent=1 // pred_region
      _
    $region13: #{sdae_forward.1} parent=1 // pred_fallthru
      _
    // Predicated region
    $region14: #{sdae_forward.1} parent=1 // pred_check
      _
    $region15: #{sdae_forward.1} parent=1 // pred_check_branch
      %26 = sbr.rel (0) target = $region17
    $region16: #{sdae_forward.1} parent=1 // pred_region
      %27 = dma.done [#allocation3], 6144
    $region17: #{sdae_forward.1} parent=1 // pred_fallthru
      _
    %v29 = vld [vmem:[%s0] sm:$0xff]
    %v30 = vpack.c.bf16 %v29, %v29
    %v31 = vld [vmem:[#allocation2] sm:$0xf]
    %v32 = vld [vmem:[#allocation2 + $0x4] sm:$0xf]
    %v33 = vld [vmem:[#allocation2 + $0x8] sm:$0xf]
    %v34 = vld [vmem:[#allocation2 + $0xc] sm:$0xf]
    %v35 = vld [vmem:[#allocation2 + $0x10] sm:$0xf]
    %v36 = vld [vmem:[#allocation2 + $0x14] sm:$0xf]
    %v37 = vld [vmem:[#allocation2 + $0x18] sm:$0xf]
    %v38 = vld [vmem:[#allocation2 + $0x1c] sm:$0xf]
    %v39 = vld [vmem:[#allocation2 + $0x20] sm:$0xf]
    %v40 = vld [vmem:[#allocation2 + $0x24] sm:$0xf]
    %v41 = vld [vmem:[#allocation2 + $0x28] sm:$0xf]
    %v42 = vld [vmem:[#allocation2 + $0x2c] sm:$0xf]
    %v43 = vld [vmem:[#allocation2 + $0x30] sm:$0xf]
    %v44 = vld [vmem:[#allocation2 + $0x34] sm:$0xf]
    %v45 = vld [vmem:[#allocation2 + $0x38] sm:$0xf]
    %v46 = vld [vmem:[#allocation2 + $0x3c] sm:$0xf]
    %v47 = vld [vmem:[%s2] sm:$0x1]
    %v48 = vlaneseq
    %v49 = vshrl.u32 %v48, 7
    %v50 = vsub.s32 0, %v49
    %v51 = vrot.slane %v47, %v50
    %v68 = vunpack.c.l.b16 %v31
    %v69 = vunpack.c.l.b16 %v32
    %v70 = vunpack.c.l.b16 %v33
    %v71 = vunpack.c.l.b16 %v34
    %v72 = vunpack.c.l.b16 %v35
    %v73 = vunpack.c.l.b16 %v36
    %v74 = vunpack.c.l.b16 %v37
    %v75 = vunpack.c.l.b16 %v38
    %v76 = vunpack.c.l.b16 %v39
    %v77 = vunpack.c.l.b16 %v40
    %v78 = vunpack.c.l.b16 %v41
    %v79 = vunpack.c.l.b16 %v42
    %v80 = vunpack.c.l.b16 %v43
    %v81 = vunpack.c.l.b16 %v44
    %v82 = vunpack.c.l.b16 %v45
    %v83 = vunpack.c.l.b16 %v46
    %v84 = vpack.c.b16 %v69, %v68
    %v85 = vpack.c.b16 %v71, %v70
    %v86 = vpack.c.b16 %v73, %v72
    %v87 = vpack.c.b16 %v75, %v74
    %v88 = vpack.c.b16 %v77, %v76
    %v89 = vpack.c.b16 %v79, %v78
    %v90 = vpack.c.b16 %v81, %v80
    %v91 = vpack.c.b16 %v83, %v82
    %100 = vmatprep.subr.bf16.mxu0 0
    %101 = vmatpush1.bf16.msra.mxu0 %v84
    %102 = vmatprep.subr.bf16.mxu0 0
    %103 = vmatpush1.bf16.msra.mxu0 %v85
    %104 = vmatprep.subr.bf16.mxu0 0
    %105 = vmatpush1.bf16.msra.mxu0 %v86
    %106 = vmatprep.subr.bf16.mxu0 0
    %107 = vmatpush1.bf16.msra.mxu0 %v87
    %108 = vmatprep.subr.bf16.mxu0 0
    %109 = vmatpush1.bf16.msra.mxu0 %v88
    %110 = vmatprep.subr.bf16.mxu0 0
    %111 = vmatpush1.bf16.msra.mxu0 %v89
    %112 = vmatprep.subr.bf16.mxu0 0
    %113 = vmatpush1.bf16.msra.mxu0 %v90
    %114 = vmatprep.subr.bf16.mxu0 0
    %115 = vmatpush1.bf16.msra.mxu0 %v91
    %116 = vmatprep.subr.bf16.mxu0 0
    %117 = vmatpush1.bf16.msra.mxu0 0
    %118 = vmatprep.subr.bf16.mxu0 0
    %119 = vmatpush1.bf16.msra.mxu0 0
    %120 = vmatprep.subr.bf16.mxu0 0
    %121 = vmatpush1.bf16.msra.mxu0 0
    %122 = vmatprep.subr.bf16.mxu0 0
    %123 = vmatpush1.bf16.msra.mxu0 0
    %124 = vmatprep.subr.bf16.mxu0 0
    %125 = vmatpush1.bf16.msra.mxu0 0
    %126 = vmatprep.subr.bf16.mxu0 0
    %127 = vmatpush1.bf16.msra.mxu0 0
    %128 = vmatprep.subr.bf16.mxu0 0
    %129 = vmatpush1.bf16.msra.mxu0 0
    %130 = vmatprep.subr.bf16.mxu0 0
    %131 = vmatpush1.bf16.msra.mxu0 0
    %132 = vmatprep.mubr.bf16.mxu0 0
    %133 = vmatmul.mubr.bf16.gmra.mrb[0].mxu0 %v30
    %v134 = vpop.f32.mrb[0].mxu0
    %v135 = vadd.f32 %v51, %v134
    %v136 = vpop.f32.mrb[0].mxu0
    %v137 = vpop.f32.mrb[0].mxu0
    %v138 = vpop.f32.mrb[0].mxu0
    %139 = vdwg.mxu0
    %v140 = vtanh.pop %v135
    %v141 = vpack.c.bf16 %v140, %v140
    %s142 = scalar_lea.vmem [#allocation2], 64
    %v143 = vld [vmem:[%s142] sm:$0xf]
    %v144 = vld [vmem:[%s142 + $0x4] sm:$0xf]
    %v145 = vld [vmem:[%s142 + $0x8] sm:$0xf]
    %v146 = vld [vmem:[%s142 + $0xc] sm:$0xf]
    %v147 = vld [vmem:[%s142 + $0x10] sm:$0xf]
    %v148 = vld [vmem:[%s142 + $0x14] sm:$0xf]
    %v149 = vld [vmem:[%s142 + $0x18] sm:$0xf]
    %v150 = vld [vmem:[%s142 + $0x1c] sm:$0xf]
    %v151 = vld [vmem:[%s142 + $0x20] sm:$0xf]
    %v152 = vld [vmem:[%s142 + $0x24] sm:$0xf]
    %v153 = vld [vmem:[%s142 + $0x28] sm:$0xf]
    %v154 = vld [vmem:[%s142 + $0x2c] sm:$0xf]
    %v155 = vld [vmem:[%s142 + $0x30] sm:$0xf]
    %v156 = vld [vmem:[%s142 + $0x34] sm:$0xf]
    %v157 = vld [vmem:[%s142 + $0x38] sm:$0xf]
    %v158 = vld [vmem:[%s142 + $0x3c] sm:$0xf]
    %v159 = vld [vmem:[%s2 + $0x1] sm:$0x1]
    %v160 = vlaneseq
    %v161 = vshrl.u32 %v160, 7
    %v162 = vsub.s32 0, %v161
    %v163 = vrot.slane %v159, %v162
    %v180 = vunpack.c.l.b16 %v143
    %v181 = vunpack.c.l.b16 %v144
    %v182 = vunpack.c.l.b16 %v145
    %v183 = vunpack.c.l.b16 %v146
    %v184 = vunpack.c.l.b16 %v147
    %v185 = vunpack.c.l.b16 %v148
    %v186 = vunpack.c.l.b16 %v149
    %v187 = vunpack.c.l.b16 %v150
    %v188 = vunpack.c.l.b16 %v151
    %v189 = vunpack.c.l.b16 %v152
    %v190 = vunpack.c.l.b16 %v153
    %v191 = vunpack.c.l.b16 %v154
    %v192 = vunpack.c.l.b16 %v155
    %v193 = vunpack.c.l.b16 %v156
    %v194 = vunpack.c.l.b16 %v157
    %v195 = vunpack.c.l.b16 %v158
    %v196 = vpack.c.b16 %v181, %v180
    %v197 = vpack.c.b16 %v183, %v182
    %v198 = vpack.c.b16 %v185, %v184
    %v199 = vpack.c.b16 %v187, %v186
    %v200 = vpack.c.b16 %v189, %v188
    %v201 = vpack.c.b16 %v191, %v190
    %v202 = vpack.c.b16 %v193, %v192
    %v203 = vpack.c.b16 %v195, %v194
    %212 = vmatprep.subr.bf16.mxu0 0
    %213 = vmatpush1.bf16.msra.mxu0 %v196
    %214 = vmatprep.subr.bf16.mxu0 0
    %215 = vmatpush1.bf16.msra.mxu0 %v197
    %216 = vmatprep.subr.bf16.mxu0 0
    %217 = vmatpush1.bf16.msra.mxu0 %v198
    %218 = vmatprep.subr.bf16.mxu0 0
    %219 = vmatpush1.bf16.msra.mxu0 %v199
    %220 = vmatprep.subr.bf16.mxu0 0
    %221 = vmatpush1.bf16.msra.mxu0 %v200
    %222 = vmatprep.subr.bf16.mxu0 0
    %223 = vmatpush1.bf16.msra.mxu0 %v201
    %224 = vmatprep.subr.bf16.mxu0 0
    %225 = vmatpush1.bf16.msra.mxu0 %v202
    %226 = vmatprep.subr.bf16.mxu0 0
    %227 = vmatpush1.bf16.msra.mxu0 %v203
    %228 = vmatprep.subr.bf16.mxu0 0
    %229 = vmatpush1.bf16.msra.mxu0 0
    %230 = vmatprep.subr.bf16.mxu0 0
    %231 = vmatpush1.bf16.msra.mxu0 0
    %232 = vmatprep.subr.bf16.mxu0 0
    %233 = vmatpush1.bf16.msra.mxu0 0
    %234 = vmatprep.subr.bf16.mxu0 0
    %235 = vmatpush1.bf16.msra.mxu0 0
    %236 = vmatprep.subr.bf16.mxu0 0
    %237 = vmatpush1.bf16.msra.mxu0 0
    %238 = vmatprep.subr.bf16.mxu0 0
    %239 = vmatpush1.bf16.msra.mxu0 0
    %240 = vmatprep.subr.bf16.mxu0 0
    %241 = vmatpush1.bf16.msra.mxu0 0
    %242 = vmatprep.subr.bf16.mxu0 0
    %243 = vmatpush1.bf16.msra.mxu0 0
    %244 = vmatprep.mubr.bf16.mxu0 0
    %245 = vmatmul.mubr.bf16.gmra.mrb[0].mxu0 %v141
    %v246 = vpop.f32.mrb[0].mxu0
    %v247 = vadd.f32 %v163, %v246
    %v248 = vpop.f32.mrb[0].mxu0
    %v249 = vpop.f32.mrb[0].mxu0
    %v250 = vpop.f32.mrb[0].mxu0
    %251 = vdwg.mxu0
    %v252 = vtanh.pop %v247
    %v253 = vpack.c.bf16 %v252, %v252
    %s254 = scalar_lea.vmem [#allocation2], 128
    %v255 = vld [vmem:[%s254] sm:$0xf]
    %v256 = vld [vmem:[%s254 + $0x4] sm:$0xf]
    %v257 = vld [vmem:[%s254 + $0x8] sm:$0xf]
    %v258 = vld [vmem:[%s254 + $0xc] sm:$0xf]
    %v259 = vld [vmem:[%s254 + $0x10] sm:$0xf]
    %v260 = vld [vmem:[%s254 + $0x14] sm:$0xf]
    %v261 = vld [vmem:[%s254 + $0x18] sm:$0xf]
    %v262 = vld [vmem:[%s254 + $0x1c] sm:$0xf]
    %v263 = vld [vmem:[%s254 + $0x20] sm:$0xf]
    %v264 = vld [vmem:[%s254 + $0x24] sm:$0xf]
    %v265 = vld [vmem:[%s254 + $0x28] sm:$0xf]
    %v266 = vld [vmem:[%s254 + $0x2c] sm:$0xf]
    %v267 = vld [vmem:[%s254 + $0x30] sm:$0xf]
    %v268 = vld [vmem:[%s254 + $0x34] sm:$0xf]
    %v269 = vld [vmem:[%s254 + $0x38] sm:$0xf]
    %v270 = vld [vmem:[%s254 + $0x3c] sm:$0xf]
    %v271 = vld [vmem:[%s2 + $0x2] sm:$0x1]
    %v272 = vlaneseq
    %v273 = vshrl.u32 %v272, 7
    %v274 = vsub.s32 0, %v273
    %v275 = vrot.slane %v271, %v274
    %v292 = vunpack.c.l.b16 %v255
    %v293 = vunpack.c.l.b16 %v256
    %v294 = vunpack.c.l.b16 %v257
    %v295 = vunpack.c.l.b16 %v258
    %v296 = vunpack.c.l.b16 %v259
    %v297 = vunpack.c.l.b16 %v260
    %v298 = vunpack.c.l.b16 %v261
    %v299 = vunpack.c.l.b16 %v262
    %v300 = vunpack.c.l.b16 %v263
    %v301 = vunpack.c.l.b16 %v264
    %v302 = vunpack.c.l.b16 %v265
    %v303 = vunpack.c.l.b16 %v266
    %v304 = vunpack.c.l.b16 %v267
    %v305 = vunpack.c.l.b16 %v268
    %v306 = vunpack.c.l.b16 %v269
    %v307 = vunpack.c.l.b16 %v270
    %v308 = vpack.c.b16 %v293, %v292
    %v309 = vpack.c.b16 %v295, %v294
    %v310 = vpack.c.b16 %v297, %v296
    %v311 = vpack.c.b16 %v299, %v298
    %v312 = vpack.c.b16 %v301, %v300
    %v313 = vpack.c.b16 %v303, %v302
    %v314 = vpack.c.b16 %v305, %v304
    %v315 = vpack.c.b16 %v307, %v306
    %324 = vmatprep.subr.bf16.mxu0 0
    %325 = vmatpush1.bf16.msra.mxu0 %v308
    %326 = vmatprep.subr.bf16.mxu0 0
    %327 = vmatpush1.bf16.msra.mxu0 %v309
    %328 = vmatprep.subr.bf16.mxu0 0
    %329 = vmatpush1.bf16.msra.mxu0 %v310
    %330 = vmatprep.subr.bf16.mxu0 0
    %331 = vmatpush1.bf16.msra.mxu0 %v311
    %332 = vmatprep.subr.bf16.mxu0 0
    %333 = vmatpush1.bf16.msra.mxu0 %v312
    %334 = vmatprep.subr.bf16.mxu0 0
    %335 = vmatpush1.bf16.msra.mxu0 %v313
    %336 = vmatprep.subr.bf16.mxu0 0
    %337 = vmatpush1.bf16.msra.mxu0 %v314
    %338 = vmatprep.subr.bf16.mxu0 0
    %339 = vmatpush1.bf16.msra.mxu0 %v315
    %340 = vmatprep.subr.bf16.mxu0 0
    %341 = vmatpush1.bf16.msra.mxu0 0
    %342 = vmatprep.subr.bf16.mxu0 0
    %343 = vmatpush1.bf16.msra.mxu0 0
    %344 = vmatprep.subr.bf16.mxu0 0
    %345 = vmatpush1.bf16.msra.mxu0 0
    %346 = vmatprep.subr.bf16.mxu0 0
    %347 = vmatpush1.bf16.msra.mxu0 0
    %348 = vmatprep.subr.bf16.mxu0 0
    %349 = vmatpush1.bf16.msra.mxu0 0
    %350 = vmatprep.subr.bf16.mxu0 0
    %351 = vmatpush1.bf16.msra.mxu0 0
    %352 = vmatprep.subr.bf16.mxu0 0
    %353 = vmatpush1.bf16.msra.mxu0 0
    %354 = vmatprep.subr.bf16.mxu0 0
    %355 = vmatpush1.bf16.msra.mxu0 0
    %356 = vmatprep.mubr.bf16.mxu0 0
    %357 = vmatmul.mubr.bf16.gmra.mrb[0].mxu0 %v253
    %v358 = vpop.f32.mrb[0].mxu0
    %v359 = vadd.f32 %v275, %v358
    %v360 = vpop.f32.mrb[0].mxu0
    %v361 = vpop.f32.mrb[0].mxu0
    %v362 = vpop.f32.mrb[0].mxu0
    %363 = vdwg.mxu0
    %v364 = vtanh.pop %v359
    %v365 = vpack.c.bf16 %v364, %v364
    %s366 = scalar_lea.vmem [#allocation2], 192
    %v367 = vld [vmem:[%s366] sm:$0xf]
    %v368 = vld [vmem:[%s366 + $0x4] sm:$0xf]
    %v369 = vld [vmem:[%s366 + $0x8] sm:$0xf]
    %v370 = vld [vmem:[%s366 + $0xc] sm:$0xf]
    %v371 = vld [vmem:[%s366 + $0x10] sm:$0xf]
    %v372 = vld [vmem:[%s366 + $0x14] sm:$0xf]
    %v373 = vld [vmem:[%s366 + $0x18] sm:$0xf]
    %v374 = vld [vmem:[%s366 + $0x1c] sm:$0xf]
    %v375 = vld [vmem:[%s366 + $0x20] sm:$0xf]
    %v376 = vld [vmem:[%s366 + $0x24] sm:$0xf]
    %v377 = vld [vmem:[%s366 + $0x28] sm:$0xf]
    %v378 = vld [vmem:[%s366 + $0x2c] sm:$0xf]
    %v379 = vld [vmem:[%s366 + $0x30] sm:$0xf]
    %v380 = vld [vmem:[%s366 + $0x34] sm:$0xf]
    %v381 = vld [vmem:[%s366 + $0x38] sm:$0xf]
    %v382 = vld [vmem:[%s366 + $0x3c] sm:$0xf]
    %v383 = vld [vmem:[%s2 + $0x3] sm:$0x1]
    %v384 = vlaneseq
    %v385 = vshrl.u32 %v384, 7
    %v386 = vsub.s32 0, %v385
    %v387 = vrot.slane %v383, %v386
    %v404 = vunpack.c.l.b16 %v367
    %v405 = vunpack.c.l.b16 %v368
    %v406 = vunpack.c.l.b16 %v369
    %v407 = vunpack.c.l.b16 %v370
    %v408 = vunpack.c.l.b16 %v371
    %v409 = vunpack.c.l.b16 %v372
    %v410 = vunpack.c.l.b16 %v373
    %v411 = vunpack.c.l.b16 %v374
    %v412 = vunpack.c.l.b16 %v375
    %v413 = vunpack.c.l.b16 %v376
    %v414 = vunpack.c.l.b16 %v377
    %v415 = vunpack.c.l.b16 %v378
    %v416 = vunpack.c.l.b16 %v379
    %v417 = vunpack.c.l.b16 %v380
    %v418 = vunpack.c.l.b16 %v381
    %v419 = vunpack.c.l.b16 %v382
    %v420 = vpack.c.b16 %v405, %v404
    %v421 = vpack.c.b16 %v407, %v406
    %v422 = vpack.c.b16 %v409, %v408
    %v423 = vpack.c.b16 %v411, %v410
    %v424 = vpack.c.b16 %v413, %v412
    %v425 = vpack.c.b16 %v415, %v414
    %v426 = vpack.c.b16 %v417, %v416
    %v427 = vpack.c.b16 %v419, %v418
    %436 = vmatprep.subr.bf16.mxu0 0
    %437 = vmatpush1.bf16.msra.mxu0 %v420
    %438 = vmatprep.subr.bf16.mxu0 0
    %439 = vmatpush1.bf16.msra.mxu0 %v421
    %440 = vmatprep.subr.bf16.mxu0 0
    %441 = vmatpush1.bf16.msra.mxu0 %v422
    %442 = vmatprep.subr.bf16.mxu0 0
    %443 = vmatpush1.bf16.msra.mxu0 %v423
    %444 = vmatprep.subr.bf16.mxu0 0
    %445 = vmatpush1.bf16.msra.mxu0 %v424
    %446 = vmatprep.subr.bf16.mxu0 0
    %447 = vmatpush1.bf16.msra.mxu0 %v425
    %448 = vmatprep.subr.bf16.mxu0 0
    %449 = vmatpush1.bf16.msra.mxu0 %v426
    %450 = vmatprep.subr.bf16.mxu0 0
    %451 = vmatpush1.bf16.msra.mxu0 %v427
    %452 = vmatprep.subr.bf16.mxu0 0
    %453 = vmatpush1.bf16.msra.mxu0 0
    %454 = vmatprep.subr.bf16.mxu0 0
    %455 = vmatpush1.bf16.msra.mxu0 0
    %456 = vmatprep.subr.bf16.mxu0 0
    %457 = vmatpush1.bf16.msra.mxu0 0
    %458 = vmatprep.subr.bf16.mxu0 0
    %459 = vmatpush1.bf16.msra.mxu0 0
    %460 = vmatprep.subr.bf16.mxu0 0
    %461 = vmatpush1.bf16.msra.mxu0 0
    %462 = vmatprep.subr.bf16.mxu0 0
    %463 = vmatpush1.bf16.msra.mxu0 0
    %464 = vmatprep.subr.bf16.mxu0 0
    %465 = vmatpush1.bf16.msra.mxu0 0
    %466 = vmatprep.subr.bf16.mxu0 0
    %467 = vmatpush1.bf16.msra.mxu0 0
    %468 = vmatprep.mubr.bf16.mxu0 0
    %469 = vmatmul.mubr.bf16.gmra.mrb[0].mxu0 %v365
    %v470 = vpop.f32.mrb[0].mxu0
    %v471 = vadd.f32 %v387, %v470
    %v472 = vpop.f32.mrb[0].mxu0
    %v473 = vpop.f32.mrb[0].mxu0
    %v474 = vpop.f32.mrb[0].mxu0
    %475 = vdwg.mxu0
    %v476 = vsub.f32 0.0, %v471
    %v477 = vmul.f32 %v476, 1.442695
    %v478 = vpow.pop %v477
    %v479 = vadd.f32 %v478, 1.0
    %v480 = vrcp.pop %v479
    %v481 = vmax.f32 %v471, 0.0
    %v482 = vpack.c.bf16 %v481, %v481
    %s483 = scalar_lea.vmem [#allocation2], 256
    %v484 = vld [vmem:[%s483] sm:$0xf]
    %v485 = vld [vmem:[%s483 + $0x4] sm:$0xf]
    %v486 = vld [vmem:[%s483 + $0x8] sm:$0xf]
    %v487 = vld [vmem:[%s483 + $0xc] sm:$0xf]
    %v488 = vld [vmem:[%s483 + $0x10] sm:$0xf]
    %v489 = vld [vmem:[%s483 + $0x14] sm:$0xf]
    %v490 = vld [vmem:[%s483 + $0x18] sm:$0xf]
    %v491 = vld [vmem:[%s483 + $0x1c] sm:$0xf]
    %v492 = vld [vmem:[%s483 + $0x20] sm:$0xf]
    %v493 = vld [vmem:[%s483 + $0x24] sm:$0xf]
    %v494 = vld [vmem:[%s483 + $0x28] sm:$0xf]
    %v495 = vld [vmem:[%s483 + $0x2c] sm:$0xf]
    %v496 = vld [vmem:[%s483 + $0x30] sm:$0xf]
    %v497 = vld [vmem:[%s483 + $0x34] sm:$0xf]
    %v498 = vld [vmem:[%s483 + $0x38] sm:$0xf]
    %v499 = vld [vmem:[%s483 + $0x3c] sm:$0xf]
    %v500 = vld [vmem:[%s2 + $0x4] sm:$0x1]
    %v501 = vlaneseq
    %v502 = vshrl.u32 %v501, 7
    %v503 = vsub.s32 0, %v502
    %v504 = vrot.slane %v500, %v503
    %v521 = vunpack.c.l.b16 %v484
    %v522 = vunpack.c.l.b16 %v485
    %v523 = vunpack.c.l.b16 %v486
    %v524 = vunpack.c.l.b16 %v487
    %v525 = vunpack.c.l.b16 %v488
    %v526 = vunpack.c.l.b16 %v489
    %v527 = vunpack.c.l.b16 %v490
    %v528 = vunpack.c.l.b16 %v491
    %v529 = vunpack.c.l.b16 %v492
    %v530 = vunpack.c.l.b16 %v493
    %v531 = vunpack.c.l.b16 %v494
    %v532 = vunpack.c.l.b16 %v495
    %v533 = vunpack.c.l.b16 %v496
    %v534 = vunpack.c.l.b16 %v497
    %v535 = vunpack.c.l.b16 %v498
    %v536 = vunpack.c.l.b16 %v499
    %v537 = vpack.c.b16 %v522, %v521
    %v538 = vpack.c.b16 %v524, %v523
    %v539 = vpack.c.b16 %v526, %v525
    %v540 = vpack.c.b16 %v528, %v527
    %v541 = vpack.c.b16 %v530, %v529
    %v542 = vpack.c.b16 %v532, %v531
    %v543 = vpack.c.b16 %v534, %v533
    %v544 = vpack.c.b16 %v536, %v535
    %553 = vmatprep.subr.bf16.mxu0 0
    %554 = vmatpush1.bf16.msra.mxu0 %v537
    %555 = vmatprep.subr.bf16.mxu0 0
    %556 = vmatpush1.bf16.msra.mxu0 %v538
    %557 = vmatprep.subr.bf16.mxu0 0
    %558 = vmatpush1.bf16.msra.mxu0 %v539
    %559 = vmatprep.subr.bf16.mxu0 0
    %560 = vmatpush1.bf16.msra.mxu0 %v540
    %561 = vmatprep.subr.bf16.mxu0 0
    %562 = vmatpush1.bf16.msra.mxu0 %v541
    %563 = vmatprep.subr.bf16.mxu0 0
    %564 = vmatpush1.bf16.msra.mxu0 %v542
    %565 = vmatprep.subr.bf16.mxu0 0
    %566 = vmatpush1.bf16.msra.mxu0 %v543
    %567 = vmatprep.subr.bf16.mxu0 0
    %568 = vmatpush1.bf16.msra.mxu0 %v544
    %569 = vmatprep.subr.bf16.mxu0 0
    %570 = vmatpush1.bf16.msra.mxu0 0
    %571 = vmatprep.subr.bf16.mxu0 0
    %572 = vmatpush1.bf16.msra.mxu0 0
    %573 = vmatprep.subr.bf16.mxu0 0
    %574 = vmatpush1.bf16.msra.mxu0 0
    %575 = vmatprep.subr.bf16.mxu0 0
    %576 = vmatpush1.bf16.msra.mxu0 0
    %577 = vmatprep.subr.bf16.mxu0 0
    %578 = vmatpush1.bf16.msra.mxu0 0
    %579 = vmatprep.subr.bf16.mxu0 0
    %580 = vmatpush1.bf16.msra.mxu0 0
    %581 = vmatprep.subr.bf16.mxu0 0
    %582 = vmatpush1.bf16.msra.mxu0 0
    %583 = vmatprep.subr.bf16.mxu0 0
    %584 = vmatpush1.bf16.msra.mxu0 0
    %585 = vmatprep.mubr.bf16.mxu0 0
    %586 = vmatmul.mubr.bf16.gmra.mrb[0].mxu0 %v482
    %v587 = vpop.f32.mrb[0].mxu0
    %v588 = vadd.f32 %v504, %v587
    %v589 = vpop.f32.mrb[0].mxu0
    %v590 = vpop.f32.mrb[0].mxu0
    %v591 = vpop.f32.mrb[0].mxu0
    %592 = vdwg.mxu0
    %v593 = vmax.f32 %v588, 0.0
    %v594 = vpack.c.bf16 %v593, %v593
    %s595 = scalar_lea.vmem [#allocation2], 320
    %v596 = vld [vmem:[%s595] sm:$0xf]
    %v597 = vld [vmem:[%s595 + $0x4] sm:$0xf]
    %v598 = vld [vmem:[%s595 + $0x8] sm:$0xf]
    %v599 = vld [vmem:[%s595 + $0xc] sm:$0xf]
    %v600 = vld [vmem:[%s595 + $0x10] sm:$0xf]
    %v601 = vld [vmem:[%s595 + $0x14] sm:$0xf]
    %v602 = vld [vmem:[%s595 + $0x18] sm:$0xf]
    %v603 = vld [vmem:[%s595 + $0x1c] sm:$0xf]
    %v604 = vld [vmem:[%s595 + $0x20] sm:$0xf]
    %v605 = vld [vmem:[%s595 + $0x24] sm:$0xf]
    %v606 = vld [vmem:[%s595 + $0x28] sm:$0xf]
    %v607 = vld [vmem:[%s595 + $0x2c] sm:$0xf]
    %v608 = vld [vmem:[%s595 + $0x30] sm:$0xf]
    %v609 = vld [vmem:[%s595 + $0x34] sm:$0xf]
    %v610 = vld [vmem:[%s595 + $0x38] sm:$0xf]
    %v611 = vld [vmem:[%s595 + $0x3c] sm:$0xf]
    %v612 = vld [vmem:[%s2 + $0x5] sm:$0x1]
    %v613 = vlaneseq
    %v614 = vshrl.u32 %v613, 7
    %v615 = vsub.s32 0, %v614
    %v616 = vrot.slane %v612, %v615
    %v633 = vunpack.c.l.b16 %v596
    %v634 = vunpack.c.l.b16 %v597
    %v635 = vunpack.c.l.b16 %v598
    %v636 = vunpack.c.l.b16 %v599
    %v637 = vunpack.c.l.b16 %v600
    %v638 = vunpack.c.l.b16 %v601
    %v639 = vunpack.c.l.b16 %v602
    %v640 = vunpack.c.l.b16 %v603
    %v641 = vunpack.c.l.b16 %v604
    %v642 = vunpack.c.l.b16 %v605
    %v643 = vunpack.c.l.b16 %v606
    %v644 = vunpack.c.l.b16 %v607
    %v645 = vunpack.c.l.b16 %v608
    %v646 = vunpack.c.l.b16 %v609
    %v647 = vunpack.c.l.b16 %v610
    %v648 = vunpack.c.l.b16 %v611
    %v649 = vpack.c.b16 %v634, %v633
    %v650 = vpack.c.b16 %v636, %v635
    %v651 = vpack.c.b16 %v638, %v637
    %v652 = vpack.c.b16 %v640, %v639
    %v653 = vpack.c.b16 %v642, %v641
    %v654 = vpack.c.b16 %v644, %v643
    %v655 = vpack.c.b16 %v646, %v645
    %v656 = vpack.c.b16 %v648, %v647
    %665 = vmatprep.subr.bf16.mxu0 0
    %666 = vmatpush1.bf16.msra.mxu0 %v649
    %667 = vmatprep.subr.bf16.mxu0 0
    %668 = vmatpush1.bf16.msra.mxu0 %v650
    %669 = vmatprep.subr.bf16.mxu0 0
    %670 = vmatpush1.bf16.msra.mxu0 %v651
    %671 = vmatprep.subr.bf16.mxu0 0
    %672 = vmatpush1.bf16.msra.mxu0 %v652
    %673 = vmatprep.subr.bf16.mxu0 0
    %674 = vmatpush1.bf16.msra.mxu0 %v653
    %675 = vmatprep.subr.bf16.mxu0 0
    %676 = vmatpush1.bf16.msra.mxu0 %v654
    %677 = vmatprep.subr.bf16.mxu0 0
    %678 = vmatpush1.bf16.msra.mxu0 %v655
    %679 = vmatprep.subr.bf16.mxu0 0
    %680 = vmatpush1.bf16.msra.mxu0 %v656
    %681 = vmatprep.subr.bf16.mxu0 0
    %682 = vmatpush1.bf16.msra.mxu0 0
    %683 = vmatprep.subr.bf16.mxu0 0
    %684 = vmatpush1.bf16.msra.mxu0 0
    %685 = vmatprep.subr.bf16.mxu0 0
    %686 = vmatpush1.bf16.msra.mxu0 0
    %687 = vmatprep.subr.bf16.mxu0 0
    %688 = vmatpush1.bf16.msra.mxu0 0
    %689 = vmatprep.subr.bf16.mxu0 0
    %690 = vmatpush1.bf16.msra.mxu0 0
    %691 = vmatprep.subr.bf16.mxu0 0
    %692 = vmatpush1.bf16.msra.mxu0 0
    %693 = vmatprep.subr.bf16.mxu0 0
    %694 = vmatpush1.bf16.msra.mxu0 0
    %695 = vmatprep.subr.bf16.mxu0 0
    %696 = vmatpush1.bf16.msra.mxu0 0
    %697 = vmatprep.mubr.bf16.mxu0 0
    %698 = vmatmul.mubr.bf16.gmra.mrb[0].mxu0 %v594
    %v699 = vpop.f32.mrb[0].mxu0
    %v700 = vadd.f32 %v616, %v699
    %v701 = vpop.f32.mrb[0].mxu0
    %v702 = vpop.f32.mrb[0].mxu0
    %v703 = vpop.f32.mrb[0].mxu0
    %704 = vdwg.mxu0
    %v705 = vlaneseq
    %v706 = vand.u32 %v705, 127
    %vm707 = vcmp.eq.s32.totalorder %v706, 120
    %709 = vset.pattern.permute.xlu0 127
    %710 = vperm.xlu0 %709, %v480
    %v711 = vpop.permute.xlu0 %710
    %v713 = vsel %vm707, %v711, %v700
    %714 = vst [vmem:[%s3] sm:$0xff] %v713
    // Predicated region
    $region18: #{sdae_forward.1} parent=1 // pred_check
      _
    $region19: #{sdae_forward.1} parent=1 // pred_check_branch
      %716 = sbr.rel (0) target = $region21
    $region20: #{sdae_forward.1} parent=1 // pred_region
      _
    $region21: #{sdae_forward.1} parent=1 // pred_fallthru
      _
    // Predicated region
    $region22: #{sdae_forward.1} parent=1 // pred_check
      _
    $region23: #{sdae_forward.1} parent=1 // pred_check_branch
      %718 = sbr.rel (0) target = $region25
    $region24: #{sdae_forward.1} parent=1 // pred_region
      _
    $region25: #{sdae_forward.1} parent=1 // pred_fallthru
      _
    %719 = vsyncpa [#allocation3], 1

</llo_original>
